<compile_context>
chip_gen: v5e
topology: v5e:2x2
jax: 0.10.0
libtpu: 0.0.40
codegen_flags: <defaults>
</compile_context>

<pallas_src>
import functools

import jax
import jax.numpy as jnp
import numpy as np
from jax import lax
from jax.experimental import pallas as pl
from jax.experimental.pallas import tpu as pltpu


# ---------------------------------------------------------------------------
# Pass A: per-row sum(x), sum(x^2) over the HW axis (rows = N*C, lanes = HW).
# ---------------------------------------------------------------------------
def _stats_kernel(x_ref, s1_ref, s2_ref, *, bh, hw, mask_lanes):
    j = pl.program_id(1)

    @pl.when(j == 0)
    def _():
        s1_ref[...] = jnp.zeros_like(s1_ref)
        s2_ref[...] = jnp.zeros_like(s2_ref)

    x = x_ref[...].astype(jnp.float32)
    if mask_lanes:  # static: only when HW % bh != 0 -> zero the OOB lanes
        col = lax.broadcasted_iota(jnp.int32, (1, bh), 1) + j * bh
        x = jnp.where(col < hw, x, 0.0)
    s1_ref[...] += jnp.sum(x, axis=1, keepdims=True)
    s2_ref[...] += jnp.sum(x * x, axis=1, keepdims=True)


# ---------------------------------------------------------------------------
# Pass B1: gating + per-expert sufficient statistics (tiled over N).
#   accumulators (scratch): n_k (1,K), S1 (C,K)=sum_n g*m1, S2 (C,K)=sum_n g*m2
#   last step finalizes rstd_ck (C,K) and (mu*rstd)_ck (C,K).
# ---------------------------------------------------------------------------
def _gate_stats_kernel(s1_ref, s2_ref, wt_ref, b_ref,
                       g_ref, rstd_ref, mustd_ref,
                       nk_acc, s1c_acc, s2c_acc,
                       *, inv_hw, eps, bn, n, mask_rows):
    i = pl.program_id(0)

    @pl.when(i == 0)
    def _():
        nk_acc[...] = jnp.zeros_like(nk_acc)
        s1c_acc[...] = jnp.zeros_like(s1c_acc)
        s2c_acc[...] = jnp.zeros_like(s2c_acc)

    m1 = s1_ref[...] * inv_hw                       # (bn, C)  phi(x) = mean_hw(x)
    m2 = s2_ref[...] * inv_hw                       # (bn, C)  mean_hw(x^2)

    logits = jnp.dot(m1, wt_ref[...], preferred_element_type=jnp.float32)
    logits = logits + b_ref[...]
    logits = logits - jnp.max(logits, axis=1, keepdims=True)
    e = jnp.exp(logits)
    g = e / jnp.sum(e, axis=1, keepdims=True)       # (bn, K) softmax over experts

    if mask_rows:  # static: only when N % bn != 0 -> zero phantom samples
        row = lax.broadcasted_iota(jnp.int32, (bn, 1), 0) + i * bn
        g = jnp.where(row < n, g, 0.0)

    g_ref[...] = g

    nk_acc[...] += jnp.sum(g, axis=0, keepdims=True)                     # (1, K)
    cdims = (((0,), (0,)), ((), ()))
    s1c_acc[...] += lax.dot_general(m1, g, cdims,
                                    preferred_element_type=jnp.float32)  # (C, K)
    s2c_acc[...] += lax.dot_general(m2, g, cdims,
                                    preferred_element_type=jnp.float32)  # (C, K)

    @pl.when(i == pl.num_programs(0) - 1)
    def _():
        inv_nk = 1.0 / nk_acc[...]                  # (1, K), exact
        mu = s1c_acc[...] * inv_nk                  # (C, K)
        e2 = s2c_acc[...] * inv_nk                  # (C, K)
        var = jnp.maximum(e2 - mu * mu, 0.0)
        rstd = lax.rsqrt(var + eps)                 # (C, K)
        rstd_ref[...] = rstd
        mustd_ref[...] = mu * rstd


# ---------------------------------------------------------------------------
# Pass B2: fold gating + expert stats into per-(n,c) scale / offset (tiled over N).
# ---------------------------------------------------------------------------
def _scale_offset_kernel(g_ref, rstd_ref, mustd_ref, alpha_ref, beta_ref,
                         scale_ref, offset_ref):
    g = g_ref[...]                                  # (bn, K)
    cdims = (((1,), (1,)), ((), ()))
    s = lax.dot_general(g, rstd_ref[...], cdims,
                        preferred_element_type=jnp.float32)   # (bn, C) sum_k g*rstd
    t = lax.dot_general(g, mustd_ref[...], cdims,
                        preferred_element_type=jnp.float32)   # (bn, C) sum_k g*mu*rstd
    alpha = alpha_ref[...]                          # (1, C)
    scale_ref[...] = alpha * s
    offset_ref[...] = beta_ref[...] - alpha * t


# ---------------------------------------------------------------------------
# Pass C: streaming apply, out = x * scale + offset  (lane-dense tiles).
# ---------------------------------------------------------------------------
def _apply_kernel(x_ref, scale_ref, offset_ref, out_ref):
    x = x_ref[...].astype(jnp.float32)
    out_ref[...] = (x * scale_ref[...] + offset_ref[...]).astype(out_ref.dtype)


# ---------------------------------------------------------------------------
# Tiling helpers.
# ---------------------------------------------------------------------------
def _round_down(x, m):
    return (x // m) * m


def _pick_row_block(rows, target, align):
    """Sublane-aligned row block.  Caps at ~rows//2 so the 'parallel' grid axis
    has >= 2 steps (v7x: 2 TensorCores) whenever rows allows it."""
    if rows <= align:
        return rows                                   # full-dim block: always legal
    half = max(align, _round_down(rows // 2, align))
    return max(align, _round_down(min(target, rows, half), align))


def _pick_lane_block(dim, target, align=128):
    """Lane-aligned block; full dim when it already fits in one tile."""
    if dim <= target:
        return dim                                    # full-dim block: always legal
    return max(align, _round_down(target, align))


# ---------------------------------------------------------------------------
# Wrapper.
# ---------------------------------------------------------------------------
def moenorm_forward(x_nchw, W, b, alpha, beta, *, num_experts, eps=1e-5):
    """MOEnorm training-mode forward.  x_nchw: (N, C, H, W) -> same shape/dtype."""
    N, C, H, Wd = x_nchw.shape
    K = num_experts
    HW = H * Wd
    rows = N * C
    dtype = x_nchw.dtype
    xf = x_nchw.reshape(rows, HW)                     # streamed in native dtype

    itemsize = jnp.dtype(dtype).itemsize
    sub_align = 16 if itemsize < 4 else 8             # bf16 sublane packing
    br = _pick_row_block(rows, 512, sub_align)
    # ~4 MiB streaming tiles: per-step overhead stays <<1% of tile DMA time even
    # at v7x's ~3.2 TB/s HBM; double-buffered pass-C working set ~4x tile bytes.
    bh_target = max(128, (4 * 1024 * 1024) // (br * itemsize))
    bh = _pick_lane_block(HW, bh_target)
    grid = (pl.cdiv(rows, br), pl.cdiv(HW, bh))
    # <= ~48 MiB: safe under v7x's 64 MiB physical VMEM; v5e/v6e have 128 MiB.
    vmem_limit = 48 * 1024 * 1024
    mask_lanes = (grid[1] * bh != HW)                 # row-edge OOB needs no mask

    # ---- pass A: per-row sum(x), sum(x^2) -----------------------------------
    s1, s2 = pl.pallas_call(
        functools.partial(_stats_kernel, bh=bh, hw=HW, mask_lanes=mask_lanes),
        out_shape=(jax.ShapeDtypeStruct((rows, 1), jnp.float32),
                   jax.ShapeDtypeStruct((rows, 1), jnp.float32)),
        grid=grid,
        in_specs=[pl.BlockSpec((br, bh), lambda i, j: (i, j))],
        out_specs=(pl.BlockSpec((br, 1), lambda i, j: (i, 0)),
                   pl.BlockSpec((br, 1), lambda i, j: (i, 0))),
        compiler_params=pltpu.CompilerParams(
            dimension_semantics=("parallel", "arbitrary"),
            vmem_limit_bytes=vmem_limit),
    )(xf)

    s1_nc = s1.reshape(N, C)
    s2_nc = s2.reshape(N, C)
    w_t = W.astype(jnp.float32).T                     # (C, K), pre-transposed
    b2 = b.reshape(1, K).astype(jnp.float32)
    alpha2 = alpha.reshape(1, C).astype(jnp.float32)
    beta2 = beta.reshape(1, C).astype(jnp.float32)

    # ---- pass B1: gating + per-expert stats (tiled over N) ------------------
    bn = N if N <= 256 else 256
    grid_n = (pl.cdiv(N, bn),)
    mask_rows = (grid_n[0] * bn != N)

    g, rstd_ck, mustd_ck = pl.pallas_call(
        functools.partial(_gate_stats_kernel, inv_hw=float(1.0 / HW),
                          eps=float(eps), bn=bn, n=N, mask_rows=mask_rows),
        out_shape=(jax.ShapeDtypeStruct((N, K), jnp.float32),
                   jax.ShapeDtypeStruct((C, K), jnp.float32),
                   jax.ShapeDtypeStruct((C, K), jnp.float32)),
        grid=grid_n,
        in_specs=[pl.BlockSpec((bn, C), lambda i: (i, 0)),
                  pl.BlockSpec((bn, C), lambda i: (i, 0)),
                  pl.BlockSpec((C, K), lambda i: (0, 0)),
                  pl.BlockSpec((1, K), lambda i: (0, 0))],
        out_specs=(pl.BlockSpec((bn, K), lambda i: (i, 0)),
                   pl.BlockSpec((C, K), lambda i: (0, 0)),
                   pl.BlockSpec((C, K), lambda i: (0, 0))),
        scratch_shapes=[pltpu.VMEM((1, K), jnp.float32),
                        pltpu.VMEM((C, K), jnp.float32),
                        pltpu.VMEM((C, K), jnp.float32)],
        compiler_params=pltpu.CompilerParams(
            dimension_semantics=("arbitrary",),
            vmem_limit_bytes=vmem_limit),
    )(s1_nc, s2_nc, w_t, b2)

    # ---- pass B2: per-(n,c) scale / offset (tiled over N) --------------------
    scale, offset = pl.pallas_call(
        _scale_offset_kernel,
        out_shape=(jax.ShapeDtypeStruct((N, C), jnp.float32),
                   jax.ShapeDtypeStruct((N, C), jnp.float32)),
        grid=grid_n,
        in_specs=[pl.BlockSpec((bn, K), lambda i: (i, 0)),
                  pl.BlockSpec((C, K), lambda i: (0, 0)),
                  pl.BlockSpec((C, K), lambda i: (0, 0)),
                  pl.BlockSpec((1, C), lambda i: (0, 0)),
                  pl.BlockSpec((1, C), lambda i: (0, 0))],
        out_specs=(pl.BlockSpec((bn, C), lambda i: (i, 0)),
                   pl.BlockSpec((bn, C), lambda i: (i, 0))),
        compiler_params=pltpu.CompilerParams(
            dimension_semantics=("parallel",),
            vmem_limit_bytes=vmem_limit),
    )(g, rstd_ck, mustd_ck, alpha2, beta2)

    # ---- pass C: streaming apply ---------------------------------------------
    scale_r = scale.reshape(rows, 1)
    offset_r = offset.reshape(rows, 1)
    out = pl.pallas_call(
        _apply_kernel,
        out_shape=jax.ShapeDtypeStruct((rows, HW), dtype),
        grid=grid,
        in_specs=[pl.BlockSpec((br, bh), lambda i, j: (i, j)),
                  pl.BlockSpec((br, 1), lambda i, j: (i, 0)),
                  pl.BlockSpec((br, 1), lambda i, j: (i, 0))],
        out_specs=pl.BlockSpec((br, bh), lambda i, j: (i, j)),
        compiler_params=pltpu.CompilerParams(
            dimension_semantics=("parallel", "parallel"),
            vmem_limit_bytes=vmem_limit),
    )(xf, scale_r, offset_r)

    return out.reshape(N, C, H, Wd)


# ---------------------------------------------------------------------------
# Pure-JAX reference mirroring the PyTorch training-mode forward.
# ---------------------------------------------------------------------------
def moenorm_reference(x_nchw, W, b, alpha, beta, *, num_experts, eps=1e-5):
    N, C, H, Wd = x_nchw.shape
    phi = jnp.mean(x_nchw, axis=(2, 3))                       # (N, C)
    logits = phi @ W.T + b                                    # (N, K)
    g = jax.nn.softmax(logits, axis=1)                        # (N, K)
    out = jnp.zeros_like(x_nchw)
    for k in range(num_experts):
        w_k = g[:, k][:, None, None, None]                    # (N,1,1,1)
        n_k = jnp.sum(g[:, k])
        mu_k = jnp.sum(jnp.mean(w_k * x_nchw, axis=(2, 3), keepdims=True),
                       axis=0, keepdims=True) / n_k
        cen = x_nchw - mu_k
        var_k = jnp.sum(jnp.mean(w_k * cen ** 2, axis=(2, 3), keepdims=True),
                        axis=0, keepdims=True) / n_k
        out = out + w_k * (cen / jnp.sqrt(var_k + eps))
    return alpha.reshape(1, C, 1, 1) * out + beta.reshape(1, C, 1, 1)


if __name__ == "__main__":
    # Small shapes consistent with the module: NCHW input, dim=C, num_experts=K.
    N, C, H, Wd = 2, 4, 16, 16
    K = 4
    eps = 1e-5

    key = jax.random.PRNGKey(0)
    kx, kw, kb = jax.random.split(key, 3)

    x = jax.random.normal(kx, (N, C, H, Wd), dtype=jnp.float32)

    # Deterministic parameter init matching __init__ semantics:
    #   W.weight = ones(K, C)/K + 0.01*randn(K, C);  W.bias ~ U(-1/sqrt(C), 1/sqrt(C))
    W = jnp.ones((K, C), jnp.float32) / K + 0.01 * jax.random.normal(kw, (K, C), jnp.float32)
    bound = 1.0 / np.sqrt(C)
    b = jax.random.uniform(kb, (K,), jnp.float32, minval=-bound, maxval=bound)
    alpha = jnp.ones((C,), jnp.float32)   # nn.Parameter(torch.ones(1, dim, 1, 1))
    beta = jnp.zeros((C,), jnp.float32)   # nn.Parameter(torch.zeros(1, dim, 1, 1))

    # f32 path
    out = moenorm_forward(x, W, b, alpha, beta, num_experts=K, eps=eps)
    out = jax.block_until_ready(out)
    ref = moenorm_reference(x, W, b, alpha, beta, num_experts=K, eps=eps)
    np.testing.assert_allclose(np.asarray(out), np.asarray(ref), rtol=1e-5, atol=1e-5)

    # bf16 streaming path (activations stay bf16 in HBM; stats in f32 in-kernel).
    x_bf = x.astype(jnp.bfloat16)
    out_bf = moenorm_forward(x_bf, W, b, alpha, beta, num_experts=K, eps=eps)
    out_bf = jax.block_until_ready(out_bf)
    ref_bf = moenorm_reference(x_bf.astype(jnp.float32), W, b, alpha, beta,
                               num_experts=K, eps=eps)
    np.testing.assert_allclose(np.asarray(out_bf.astype(jnp.float32)),
                               np.asarray(ref_bf), rtol=5e-2, atol=5e-2)

    print("KERNEL_OK")
</pallas_src>

<mosaic_0001>
module attributes {stable_mosaic.version = 11 : i64} {
  func.func @_stats_kernel(%arg0: i32, %arg1: i32, %arg2: memref<8x256xf32, #tpu.memory_space<vmem>>, %arg3: memref<8x1xf32, #tpu.memory_space<vmem>>, %arg4: memref<8x1xf32, #tpu.memory_space<vmem>>) attributes {dimension_semantics = [#tpu.dimension_semantics<parallel>, #tpu.dimension_semantics<arbitrary>], iteration_bounds = array<i64: 1, 1>, scalar_prefetch = 0 : i64, scratch_operands = 0 : i64, tpu.core_type = #tpu.core_type<tc>, window_params = [{transform_indices = @transform_0, window_bounds = array<i64: 8, 256>}, {transform_indices = @transform_1, window_bounds = array<i64: 8, 1>}, {transform_indices = @transform_2, window_bounds = array<i64: 8, 1>}]} {
    %c0_i32 = arith.constant 0 : i32
    %0 = arith.cmpi eq, %arg1, %c0_i32 : i32
    %1 = arith.extui %0 : i1 to i32
    %c0_i32_0 = arith.constant 0 : i32
    %2 = arith.cmpi ne, %1, %c0_i32_0 : i32
    scf.if %2 {
      %cst_11 = arith.constant 0.000000e+00 : f32
      %15 = vector.broadcast %cst_11 : f32 to vector<8x1xf32>
      %c0_12 = arith.constant 0 : index
      %c0_13 = arith.constant 0 : index
      %16 = vector.load %arg3[%c0_12, %c0_13] : memref<8x1xf32, #tpu.memory_space<vmem>>, vector<8x1xf32>
      tpu.vector_store %arg3[%c0_12, %c0_13], %15 {strides = array<i32>} : memref<8x1xf32, #tpu.memory_space<vmem>>, vector<8x1xf32>,
      %cst_14 = arith.constant 0.000000e+00 : f32
      %17 = vector.broadcast %cst_14 : f32 to vector<8x1xf32>
      %c0_15 = arith.constant 0 : index
      %c0_16 = arith.constant 0 : index
      %18 = vector.load %arg4[%c0_15, %c0_16] : memref<8x1xf32, #tpu.memory_space<vmem>>, vector<8x1xf32>
      tpu.vector_store %arg4[%c0_15, %c0_16], %17 {strides = array<i32>} : memref<8x1xf32, #tpu.memory_space<vmem>>, vector<8x1xf32>,
    } else {
    }
    %c0 = arith.constant 0 : index
    %c0_1 = arith.constant 0 : index
    %3 = vector.load %arg2[%c0, %c0_1] : memref<8x256xf32, #tpu.memory_space<vmem>>, vector<8x256xf32>
    %c0_2 = arith.constant 0 : index
    %c0_3 = arith.constant 0 : index
    %4 = vector.load %arg3[%c0_2, %c0_3] : memref<8x1xf32, #tpu.memory_space<vmem>>, vector<8x1xf32>
    %cst = arith.constant dense<0.000000e+00> : vector<8xf32>
    %5 = vector.multi_reduction <add>, %3, %cst [1] : vector<8x256xf32> to vector<8xf32>
    %6 = vector.shape_cast %5 : vector<8xf32> to vector<8x1xf32>
    %7 = arith.addf %4, %6 : vector<8x1xf32>
    %c0_4 = arith.constant 0 : index
    %c0_5 = arith.constant 0 : index
    %8 = vector.load %arg3[%c0_4, %c0_5] : memref<8x1xf32, #tpu.memory_space<vmem>>, vector<8x1xf32>
    tpu.vector_store %arg3[%c0_4, %c0_5], %7 {strides = array<i32>} : memref<8x1xf32, #tpu.memory_space<vmem>>, vector<8x1xf32>,
    %c0_6 = arith.constant 0 : index
    %c0_7 = arith.constant 0 : index
    %9 = vector.load %arg4[%c0_6, %c0_7] : memref<8x1xf32, #tpu.memory_space<vmem>>, vector<8x1xf32>
    %10 = arith.mulf %3, %3 : vector<8x256xf32>
    %cst_8 = arith.constant dense<0.000000e+00> : vector<8xf32>
    %11 = vector.multi_reduction <add>, %10, %cst_8 [1] : vector<8x256xf32> to vector<8xf32>
    %12 = vector.shape_cast %11 : vector<8xf32> to vector<8x1xf32>
    %13 = arith.addf %9, %12 : vector<8x1xf32>
    %c0_9 = arith.constant 0 : index
    %c0_10 = arith.constant 0 : index
    %14 = vector.load %arg4[%c0_9, %c0_10] : memref<8x1xf32, #tpu.memory_space<vmem>>, vector<8x1xf32>
    tpu.vector_store %arg4[%c0_9, %c0_10], %13 {strides = array<i32>} : memref<8x1xf32, #tpu.memory_space<vmem>>, vector<8x1xf32>,
    return
  }
  func.func @transform_0(%arg0: i32, %arg1: i32) -> (i32, i32) {
    %c0_i32 = arith.constant 0 : i32
    return %arg0, %arg1 : i32, i32
  }
  func.func @transform_1(%arg0: i32, %arg1: i32) -> (i32, i32) {
    %c0_i32 = arith.constant 0 : i32
    %c0_i32_0 = arith.constant 0 : i32
    return %arg0, %c0_i32 : i32, i32
  }
  func.func @transform_2(%arg0: i32, %arg1: i32) -> (i32, i32) {
    %c0_i32 = arith.constant 0 : i32
    %c0_i32_0 = arith.constant 0 : i32
    return %arg0, %c0_i32 : i32, i32
  }
}

</mosaic_0001>

<llo_original>
// kernel: tpu_custom_call.1
$region0: #{tpu_custom_call.1}
  #allocation0 [shape = 'u32[]', space=smem, size = 0x4, offset = 0x4, fixed_abs, tag = 'smem constant byte address 0x4 - core index']
  #allocation1 [shape = 'u32[72,128]{1,0:T(1,128)}', space=vmem, size = 0x9000, scoped, tag = 'internal scratch']
  %s0 = inlined_call_operand.hbm [shape: f32[8,256], index: 0, kind: input, shape index: {}]
  %s1 = inlined_call_operand.vmem [shape: f32[8,1], index: 1, kind: output, shape index: {0}]
  %s2 = inlined_call_operand.vmem [shape: f32[8,1], index: 2, kind: output, shape index: {1}]
  %3 = xla_tuple %s1, %s2
  %s4 = sld [smem:[#allocation0]]
  $region30: #{tpu_custom_call.1} parent=0
    _
  %s6 = ssub.s32 1, %s4
  %s7 = scalar_select 0, %s6, %s4
  $region1: #{tpu_custom_call.1} parent=0
    #allocation2 [shape = 'u8[8192]{0}', space=vmem, size = 0x2000, scoped, tag = 'input window, operand 0, single buffered']
    #allocation3 [shape = 's32[1]{0}', space=sflag, size = 0x4, scoped, tag = 'scoped memory for tpu_custom_call.1']
    %8 = vsyncpa [#allocation3], 0
    // Predicated region
    $region2: #{tpu_custom_call.1} parent=1 // pred_check
      _
    $region3: #{tpu_custom_call.1} parent=1 // pred_check_branch
      %10 = sbr.rel (0) target = $region5
    $region4: #{tpu_custom_call.1} parent=1 // pred_region
      %12 = vsyncadd [#allocation3], 0
      %s14 = sshll.u32 %s0, 4
      %s15 = int_to_ptr.hbm [resolvable:$true] %s14
      %s16 = sshll.u32 [#allocation2], 4
      %s17 = int_to_ptr.vmem [resolvable:$true] %s16
      %19 = dma.hbm_to_vmem [thread:$0]  %s15, 256, %s17, [#allocation3]
    $region5: #{tpu_custom_call.1} parent=1 // pred_fallthru
      _
    // Predicated region
    $region6: #{tpu_custom_call.1} parent=1 // pred_check
      _
    $region7: #{tpu_custom_call.1} parent=1 // pred_check_branch
      %21 = sbr.rel (0) target = $region9
    $region8: #{tpu_custom_call.1} parent=1 // pred_region
      %23 = dma.done [#allocation3], 256
    $region9: #{tpu_custom_call.1} parent=1 // pred_fallthru
      _
    %p24 = scmp.eq.s32.totalorder 0, 0
    // Predicated region
    $region10: #{tpu_custom_call.1} parent=1 // pred_check
      %p25 = pneg %p24
    $region11: #{tpu_custom_call.1} parent=1 // pred_check_branch
      %27 = sbr.rel (%p25) target = $region13
    $region12: #{tpu_custom_call.1} parent=1 // pred_region
      %vm28 = vcmask 7168
      %29 = vst.msk [vmem:[%s1] sm:$0xff] %vm28, 0.0
      %30 = vst.msk [vmem:[%s2] sm:$0xff] %vm28, 0.0
    $region13: #{tpu_custom_call.1} parent=1 // pred_fallthru
      _
    %v31 = vld [vmem:[#allocation2] sm:$0xff]
    %v32 = vld [vmem:[#allocation2 + $0x8] sm:$0xff]
    %v33 = vld [vmem:[%s1] sm:$0xff]
    %v34 = vadd.f32 %v31, %v32
    %35 = vadd.xlane.f32.xlu0 %v34
    %v36 = vpop.xlane.xlu0 %35
    %v37 = vadd.f32 %v33, %v36
    %vm38 = vcmask 7168
    %39 = vst.msk [vmem:[%s1] sm:$0xff] %vm38, %v37
    %v40 = vld [vmem:[%s2] sm:$0xff]
    %v41 = vmul.f32 %v31, %v31
    %v42 = vmul.f32 %v32, %v32
    %v43 = vadd.f32 %v41, %v42
    %44 = vadd.xlane.f32.xlu0 %v43
    %v45 = vpop.xlane.xlu0 %44
    %v46 = vadd.f32 %v40, %v45
    %47 = vst.msk [vmem:[%s2] sm:$0xff] %vm38, %v46
    // Predicated region
    $region14: #{tpu_custom_call.1} parent=1 // pred_check
      _
    $region15: #{tpu_custom_call.1} parent=1 // pred_check_branch
      %49 = sbr.rel (0) target = $region17
    $region16: #{tpu_custom_call.1} parent=1 // pred_region
      _
    $region17: #{tpu_custom_call.1} parent=1 // pred_fallthru
      _
    // Predicated region
    $region18: #{tpu_custom_call.1} parent=1 // pred_check
      _
    $region19: #{tpu_custom_call.1} parent=1 // pred_check_branch
      %51 = sbr.rel (0) target = $region21
    $region20: #{tpu_custom_call.1} parent=1 // pred_region
      _
    $region21: #{tpu_custom_call.1} parent=1 // pred_fallthru
      _
    // Predicated region
    $region22: #{tpu_custom_call.1} parent=1 // pred_check
      _
    $region23: #{tpu_custom_call.1} parent=1 // pred_check_branch
      %53 = sbr.rel (0) target = $region25
    $region24: #{tpu_custom_call.1} parent=1 // pred_region
      _
    $region25: #{tpu_custom_call.1} parent=1 // pred_fallthru
      _
    // Predicated region
    $region26: #{tpu_custom_call.1} parent=1 // pred_check
      _
    $region27: #{tpu_custom_call.1} parent=1 // pred_check_branch
      %55 = sbr.rel (0) target = $region29
    $region28: #{tpu_custom_call.1} parent=1 // pred_region
      _
    $region29: #{tpu_custom_call.1} parent=1 // pred_fallthru
      _
    %56 = vsyncpa [#allocation3], 1

</llo_original>
